<compile_context>
chip_gen: v7x
topology: tpu7x:2x2x1
jax: 0.10.0
libtpu: 0.0.40
codegen_flags: <defaults>
</compile_context>

<pallas_src>
import functools
import re

import numpy as np
import jax
import jax.numpy as jnp
from jax import lax
from jax.experimental import pallas as pl
from jax.experimental.pallas import tpu as pltpu


_SIGMA = 0.5  # width of the Gaussian shell-binning kernel


# ----------------------------------------------------------------------------
# Hardware detection (best effort; falls back to the conservative choice)
# ----------------------------------------------------------------------------
@functools.lru_cache(maxsize=1)
def _tpu_generation():
    try:
        kind = jax.devices()[0].device_kind.lower()
    except Exception:
        return 0
    m = re.search(r"(\d+)", kind)
    return int(m.group(1)) if m else 0


def _default_num_parallel():
    # A leading "parallel" grid axis only pays off on 2-TensorCore chips (v7x+).
    return 2 if _tpu_generation() >= 7 else 1


def _default_weight_dtype():
    # bf16 VPU/EUP exists on v6e/v7x; v5e (and unknown chips) stay in f32.
    return jnp.bfloat16 if _tpu_generation() >= 6 else jnp.float32


# ----------------------------------------------------------------------------
# Pallas kernel 1: TKE spectrum accumulation over |k|^2 bins
#   For each (parallel slice p, bin tile m):
#     kmag[tile]  = sqrt(base + iota)                 (in-kernel, no DMA)
#     w[tile, Kp] = exp(-(kmag - k_node)^2 / (2 s^2)) (bf16 on v6e/v7x)
#     out[p]     += e_binned[B2, tile] @ w            (MXU, f32 accumulator)
# ----------------------------------------------------------------------------
def _spectrum_kernel(neg_inv_2sig2, tile, compute_dtype, e_ref, kn_ref, out_ref):
    p, m = pl.program_id(0), pl.program_id(1)

    @pl.when(m == 0)
    def _():
        out_ref[...] = jnp.zeros_like(out_ref)

    # Bin index == integer |k|^2 (dense binning), reconstructed from the tile's
    # base index: no kmag input stream, no lane-sparse (tile,1) DMA.
    base = (p * pl.num_programs(1) + m) * tile
    k2 = base + lax.broadcasted_iota(jnp.int32, (tile, kn_ref.shape[-1]), 0)
    kmag = jnp.sqrt(k2.astype(jnp.float32))          # EUP sqrt; negligible post-binning

    # d is formed in f32 (cancellation-safe), then squared / exp'd in
    # compute_dtype: bf16 on v6e/v7x halves EUP/VALU work and w vreg traffic.
    d = (kmag - kn_ref[...]).astype(compute_dtype)   # [tile, Kp]
    w = jnp.exp((d * d) * neg_inv_2sig2)             # EUP exp, stays in compute_dtype
    out_ref[...] += jnp.dot(e_ref[...].astype(compute_dtype), w,
                            preferred_element_type=jnp.float32)[None]


def spectrum_pallas(e_binned, knodes_row, *, tile, num_parallel, weight_dtype,
                    sigma=_SIGMA):
    """e_binned: [B2, Np] shell-binned energies (bin index == integer |k|^2,
    zero-padded to Np = P*NM*tile); knodes_row: [1, Kp] (zero-padded).
    Returns the (un-logged) spectrum [B2, Kp]."""
    B2, Np = e_binned.shape
    Kp = knodes_row.shape[-1]
    P = num_parallel
    NM = Np // (P * tile)
    assert NM * P * tile == Np, "bin axis must be padded to P * NM * tile"
    neg_inv = -1.0 / (2.0 * sigma * sigma)

    # Output kept as (P, B2, Kp) with block (1, B2, Kp): the last two block
    # dims equal the full array dims, which keeps small B2 legal for any P.
    partial = pl.pallas_call(
        functools.partial(_spectrum_kernel, neg_inv, tile, weight_dtype),
        out_shape=jax.ShapeDtypeStruct((P, B2, Kp), jnp.float32),
        grid_spec=pltpu.PrefetchScalarGridSpec(
            num_scalar_prefetch=0,
            grid=(P, NM),
            in_specs=[
                pl.BlockSpec((B2, tile), lambda p, m: (0, p * NM + m)),
                pl.BlockSpec((1, Kp), lambda p, m: (0, 0)),
            ],
            out_specs=pl.BlockSpec((1, B2, Kp), lambda p, m: (p, 0, 0)),
        ),
        compiler_params=pltpu.CompilerParams(
            dimension_semantics=("parallel", "arbitrary"),
            vmem_limit_bytes=32 * 1024 * 1024),
    )(e_binned, knodes_row)
    return partial.sum(axis=0)                    # combine per-core partials


# ----------------------------------------------------------------------------
# Pallas kernel 2: weighted L2 distance between log spectra (Gram form)
#   D[i,j]^2 = slope * ( sum_k w la_i^2 + sum_k w lb_j^2 - 2 (la_i*w).lb_j )
# ----------------------------------------------------------------------------
def _distance_kernel(slope, la_ref, lb_ref, w_ref, d_ref):
    la = la_ref[...]                                   # [Ba, K]
    lb = lb_ref[...]                                   # [Bb, K]
    w = w_ref[...]                                     # [1,  K]
    dn = (((1,), (1,)), ((), ()))                      # contract last dims
    sa = lax.dot_general(la * la, w, dn, preferred_element_type=jnp.float32)   # [Ba,1]
    sb = lax.dot_general(w, lb * lb, dn, preferred_element_type=jnp.float32)   # [1,Bb]
    cr = lax.dot_general(la * w, lb, dn, preferred_element_type=jnp.float32)   # [Ba,Bb]
    d2 = jnp.maximum(sa + sb - 2.0 * cr, 0.0)          # clamp tiny negatives
    d_ref[...] = jnp.sqrt(slope * d2)


def distance_pallas(log_a, log_b, weights, slope):
    Ba, K = log_a.shape
    Bb = log_b.shape[0]
    w2 = weights.reshape(1, K).astype(jnp.float32)
    return pl.pallas_call(
        functools.partial(_distance_kernel, float(slope)),
        out_shape=jax.ShapeDtypeStruct((Ba, Bb), jnp.float32),
        grid=(1,),
        in_specs=[
            pl.BlockSpec((Ba, K), lambda i: (0, 0)),
            pl.BlockSpec((Bb, K), lambda i: (0, 0)),
            pl.BlockSpec((1, K), lambda i: (0, 0)),
        ],
        out_specs=pl.BlockSpec((Ba, Bb), lambda i: (0, 0)),
    )(log_a.astype(jnp.float32), log_b.astype(jnp.float32), w2)


# ----------------------------------------------------------------------------
# Host-side helpers (cached numpy; depend only on the grid shape)
# ----------------------------------------------------------------------------
def _tile_and_pad(n_bins, tm, P):
    """Pick NM first, then tile = round_up(ceil(n_bins/(P*NM)), 128): padding
    waste is bounded (< 128*P*NM bins) instead of up to P*tile-1."""
    NM = max(1, int(round(n_bins / float(P * tm))))
    per = -(-n_bins // (P * NM))                       # ceil
    tile = max(128, ((per + 127) // 128) * 128)
    return tile, NM, P * NM * tile


@functools.lru_cache(maxsize=8)
def _mode_binning_np(D_, H, W):
    """Static per-(D,H,W) tables: integer |k|^2 per rfft mode, Hermitian
    multiplicity per kz, and the dense bin count.  Cached as numpy (not device
    arrays) so multi-device / device changes cannot pin stale buffers."""
    Wr = W // 2 + 1
    kx = np.fft.fftfreq(D_) * D_
    ky = np.fft.fftfreq(H) * H
    kz = np.arange(Wr, dtype=np.float64)               # rfft half-axis
    k2 = (kx[:, None, None] ** 2 + ky[None, :, None] ** 2
          + kz[None, None, :] ** 2)
    bins = np.rint(k2).astype(np.int32).reshape(-1)    # exact: |k|^2 is integer
    mult = np.full((Wr,), 2.0, dtype=np.float32)       # Hermitian multiplicity
    mult[0] = 1.0
    if W % 2 == 0:
        mult[W // 2] = 1.0
    n_bins = int(bins.max()) + 1                       # dense in |k|^2
    return bins, mult, n_bins


# ----------------------------------------------------------------------------
# Synthetic tke_spectrum module (the injected dependency of the PyTorch class)
# ----------------------------------------------------------------------------
def log_tke_spectrum(u, k, *, tm=4096, num_parallel=None, weight_dtype=None):
    """u: [B, 3, D, H, W] fluctuating velocity; k: [K] continuous wavenumbers.
    Returns log E(k): [B, K]."""
    if num_parallel is None:
        num_parallel = _default_num_parallel()
    if weight_dtype is None:
        weight_dtype = _default_weight_dtype()

    B, C, D_, H, W = u.shape
    N = D_ * H * W
    Wr = W // 2 + 1
    Mr = D_ * H * Wr

    # TODO(synk): 3D (r)FFT has no clean Pallas equivalent; done in plain JAX.
    u_hat = jnp.fft.rfftn(u, axes=(-3, -2, -1)) / N        # [B, 3, D, H, Wr]

    bins_np, mult_np, n_bins = _mode_binning_np(D_, H, W)

    # Per-mode energy reduced over the 3 components (+ Hermitian multiplicity)
    # in the wrapper, so it fuses with the FFT post-processing.
    e = 0.5 * jnp.sum(jnp.real(u_hat) ** 2 + jnp.imag(u_hat) ** 2, axis=1)
    e = (e * jnp.asarray(mult_np)).reshape(B, Mr).astype(jnp.float32)

    # Exact pre-binning: all modes sharing an integer |k|^2 share their shell
    # weights, so the Pallas kernel only sees n_bins << Mr "modes".
    tile, NM, Np = _tile_and_pad(n_bins, tm, num_parallel)
    # TODO(synk): the static-index segment-sum stays in XLA (one scatter-add
    # pass over e); a dedicated Pallas reduction kernel is possible but not
    # needed at these sizes.
    e_binned = jax.ops.segment_sum(e.T, jnp.asarray(bins_np),
                                   num_segments=Np).T       # [B, Np], zero-padded

    # Gauss-Legendre nodes padded to a lane-dense K (multiple of 128).
    K = int(k.shape[0])
    Kp = ((K + 127) // 128) * 128
    kn = jnp.zeros((1, Kp), jnp.float32).at[0, :K].set(k.astype(jnp.float32))

    spec = spectrum_pallas(e_binned, kn, tile=tile, num_parallel=num_parallel,
                           weight_dtype=weight_dtype)       # [B, Kp]
    # Slice off padded k columns, then floor so empty shells / identical
    # fields cannot produce -inf/NaN.
    return jnp.log(jnp.maximum(spec[:, :K], jnp.finfo(jnp.float32).tiny))


# ----------------------------------------------------------------------------
# The module itself
# ----------------------------------------------------------------------------
class LogTKESpectrumL2Distance:
    def __init__(self, tke_spectrum, n: int = 64):
        self.tke_spectrum = tke_spectrum
        self.n = n
        nodes, weights = np.polynomial.legendre.leggauss(n)  # == roots_legendre
        self.legendre_nodes = jnp.asarray(nodes, dtype=jnp.float32)
        self.legendre_weights = jnp.asarray(weights, dtype=jnp.float32)

    def __call__(self, u_a, u_b, u_mean):
        assert u_a.shape[-4] == 3
        assert u_b.shape[-4] == 3
        assert u_mean.shape[-4] == 3
        assert u_a.shape[-3:] == u_b.shape[-3:]
        assert u_a.shape[-3:] == u_mean.shape[-3:]
        k_min = 1.0
        k_max = float((min(u_a.shape[-3:]) - 1) // 2)
        slope = (k_max - k_min) / 2.0
        k = slope * self.legendre_nodes + ((k_max - k_min) / 2.0 + k_min)

        # Fuse both spectra into a single FFT + single Pallas pass by stacking
        # on the batch axis: the in-kernel Gaussian weight tiles (the dominant
        # cost) are amortized over all batch rows.  Stack more fields here
        # when available — throughput scales ~linearly up to B2 ~ 64-128.
        Ba = u_a.shape[0]
        u_all = jnp.concatenate([u_a - u_mean, u_b - u_mean], axis=0)
        log_all = self.tke_spectrum(u_all, k)            # [Ba+Bb, n]
        log_tke_a = log_all[:Ba]
        log_tke_b = log_all[Ba:]

        D = distance_pallas(log_tke_a, log_tke_b, self.legendre_weights, slope)
        return D, log_tke_a, log_tke_b, k


if __name__ == "__main__":
    key = jax.random.PRNGKey(0)
    B, C, S = 2, 3, 16
    k1, k2, k3 = jax.random.split(key, 3)
    u_a = jax.random.normal(k1, (B, C, S, S, S), dtype=jnp.float32)
    u_b = jax.random.normal(k2, (B, C, S, S, S), dtype=jnp.float32)
    u_mean = jax.random.normal(k3, (B, C, S, S, S), dtype=jnp.float32)

    # ---- strict validation with the f32 weight path (exact configuration) --
    metric_f32 = LogTKESpectrumL2Distance(
        functools.partial(log_tke_spectrum, weight_dtype=jnp.float32), n=64)
    D, log_a, log_b, k = metric_f32(u_a, u_b, u_mean)
    jax.block_until_ready((D, log_a, log_b, k))

    assert D.shape == (B, B)
    assert log_a.shape == (B, 64) and log_b.shape == (B, 64)
    assert k.shape == (64,)
    assert bool(jnp.all(jnp.isfinite(D)))

    # Pure-JAX reference (full fftn + dense Gaussian shell matrix).
    def _ref_log_spectrum(u, kk):
        Bb, Cc, Dd, Hh, Ww = u.shape
        N = Dd * Hh * Ww
        u_hat = jnp.fft.fftn(u, axes=(-3, -2, -1)) / N
        e = 0.5 * jnp.sum(jnp.abs(u_hat) ** 2, axis=1).reshape(Bb, N)
        kx = jnp.fft.fftfreq(Dd) * Dd
        ky = jnp.fft.fftfreq(Hh) * Hh
        kz = jnp.fft.fftfreq(Ww) * Ww
        kmag = jnp.sqrt(kx[:, None, None] ** 2 + ky[None, :, None] ** 2
                        + kz[None, None, :] ** 2).reshape(N)
        wmat = jnp.exp(-((kmag[:, None] - kk[None, :]) ** 2)
                       / (2.0 * _SIGMA ** 2))
        return jnp.log(e @ wmat)

    ref_a = _ref_log_spectrum(u_a - u_mean, k)
    ref_b = _ref_log_spectrum(u_b - u_mean, k)
    slope_ref = (float((S - 1) // 2) - 1.0) / 2.0
    ref_D = jnp.sqrt(slope_ref * jnp.einsum(
        "ijk,k->ij", (ref_a[:, None] - ref_b[None]) ** 2,
        metric_f32.legendre_weights))
    np.testing.assert_allclose(np.asarray(log_a), np.asarray(ref_a),
                               rtol=5e-3, atol=5e-3)
    np.testing.assert_allclose(np.asarray(log_b), np.asarray(ref_b),
                               rtol=5e-3, atol=5e-3)
    np.testing.assert_allclose(np.asarray(D), np.asarray(ref_D),
                               rtol=5e-3, atol=5e-3)

    # ---- hardware-default path (bf16 weight tiles on v6e/v7x, P=2 on v7x) --
    metric_hw = LogTKESpectrumL2Distance(log_tke_spectrum, n=64)
    D_hw, log_a_hw, log_b_hw, _ = metric_hw(u_a, u_b, u_mean)
    jax.block_until_ready((D_hw, log_a_hw, log_b_hw))
    assert bool(jnp.all(jnp.isfinite(D_hw)))
    # bf16 weights perturb log E by ~1e-2 at most; sanity-band the spectra.
    np.testing.assert_allclose(np.asarray(log_a_hw), np.asarray(ref_a),
                               rtol=5e-2, atol=5e-2)
    np.testing.assert_allclose(np.asarray(log_b_hw), np.asarray(ref_b),
                               rtol=5e-2, atol=5e-2)

    print("KERNEL_OK")
</pallas_src>

<mosaic_0001>
module attributes {stable_mosaic.version = 11 : i64} {
  func.func @_spectrum_kernel(%arg0: i32, %arg1: i32, %arg2: memref<4x256xf32, #tpu.memory_space<vmem>>, %arg3: memref<1x128xf32, #tpu.memory_space<vmem>>, %arg4: memref<1x4x128xf32, #tpu.memory_space<vmem>>) attributes {dimension_semantics = [#tpu.dimension_semantics<parallel>, #tpu.dimension_semantics<arbitrary>], iteration_bounds = array<i64: 1, 1>, scalar_prefetch = 0 : i64, scratch_operands = 0 : i64, tpu.core_type = #tpu.core_type<tc>, window_params = [{transform_indices = @transform_0, window_bounds = array<i64: 4, 256>}, {pipeline_mode = #tpu.pipeline_mode<synchronous>, transform_indices = @transform_1, window_bounds = array<i64: 1, 128>}, {transform_indices = @transform_2, window_bounds = array<i64: 1, 4, 128>}]} {
    %c0_i32 = arith.constant 0 : i32
    %0 = arith.cmpi eq, %arg1, %c0_i32 : i32
    %1 = arith.extui %0 : i1 to i32
    %c0_i32_0 = arith.constant 0 : i32
    %2 = arith.cmpi ne, %1, %c0_i32_0 : i32
    scf.if %2 {
      %cst_11 = arith.constant 0.000000e+00 : f32
      %24 = vector.broadcast %cst_11 : f32 to vector<1x4x128xf32>
      %c0_12 = arith.constant 0 : index
      %c0_13 = arith.constant 0 : index
      %c0_14 = arith.constant 0 : index
      %25 = vector.load %arg4[%c0_12, %c0_13, %c0_14] : memref<1x4x128xf32, #tpu.memory_space<vmem>>, vector<1x4x128xf32>
      tpu.vector_store %arg4[%c0_12, %c0_13, %c0_14], %24 {strides = array<i32>} : memref<1x4x128xf32, #tpu.memory_space<vmem>>, vector<1x4x128xf32>,
    } else {
    }
    %c1_i32 = arith.constant 1 : i32
    %3 = arith.muli %arg0, %c1_i32 : i32
    %4 = arith.addi %3, %arg1 : i32
    %c256_i32 = arith.constant 256 : i32
    %5 = arith.muli %4, %c256_i32 : i32
    %6 = tpu.iota {dimensions = array<i32: 0>} : vector<256x128xi32>
    %7 = vector.broadcast %5 : i32 to vector<256x128xi32>
    %8 = arith.addi %7, %6 : vector<256x128xi32>
    %9 = arith.sitofp %8 : vector<256x128xi32> to vector<256x128xf32>
    %10 = math.sqrt %9 : vector<256x128xf32>
    %c0 = arith.constant 0 : index
    %c0_1 = arith.constant 0 : index
    %11 = vector.load %arg3[%c0, %c0_1] : memref<1x128xf32, #tpu.memory_space<vmem>>, vector<1x128xf32>
    %12 = vector.broadcast %11 : vector<1x128xf32> to vector<256x128xf32>
    %13 = arith.subf %10, %12 : vector<256x128xf32>
    %14 = arith.mulf %13, %13 : vector<256x128xf32>
    %cst = arith.constant -2.000000e+00 : f32
    %15 = vector.broadcast %cst : f32 to vector<256x128xf32>
    %16 = arith.mulf %14, %15 : vector<256x128xf32>
    %17 = math.exp %16 : vector<256x128xf32>
    %c0_2 = arith.constant 0 : index
    %c0_3 = arith.constant 0 : index
    %c0_4 = arith.constant 0 : index
    %18 = vector.load %arg4[%c0_2, %c0_3, %c0_4] : memref<1x4x128xf32, #tpu.memory_space<vmem>>, vector<1x4x128xf32>
    %c0_5 = arith.constant 0 : index
    %c0_6 = arith.constant 0 : index
    %19 = vector.load %arg2[%c0_5, %c0_6] : memref<4x256xf32, #tpu.memory_space<vmem>>, vector<4x256xf32>
    %cst_7 = arith.constant dense<0.000000e+00> : vector<4x128xf32>
    %20 = tpu.matmul %19, %17, %cst_7 {dimension_numbers = #tpu.dot_dimension_numbers<[1], [0], [0], [1], [0, 0, 1, 1], [], []>} : vector<4x256xf32>, vector<256x128xf32>, vector<4x128xf32> -> vector<4x128xf32>
    %21 = vector.shape_cast %20 : vector<4x128xf32> to vector<1x4x128xf32>
    %22 = arith.addf %18, %21 : vector<1x4x128xf32>
    %c0_8 = arith.constant 0 : index
    %c0_9 = arith.constant 0 : index
    %c0_10 = arith.constant 0 : index
    %23 = vector.load %arg4[%c0_8, %c0_9, %c0_10] : memref<1x4x128xf32, #tpu.memory_space<vmem>>, vector<1x4x128xf32>
    tpu.vector_store %arg4[%c0_8, %c0_9, %c0_10], %22 {strides = array<i32>} : memref<1x4x128xf32, #tpu.memory_space<vmem>>, vector<1x4x128xf32>,
    return
  }
  func.func @transform_0(%arg0: i32, %arg1: i32) -> (i32, i32) {
    %c1_i32 = arith.constant 1 : i32
    %0 = arith.muli %arg0, %c1_i32 : i32
    %1 = arith.addi %0, %arg1 : i32
    %c0_i32 = arith.constant 0 : i32
    %c0_i32_0 = arith.constant 0 : i32
    return %c0_i32, %1 : i32, i32
  }
  func.func @transform_1(%arg0: i32, %arg1: i32) -> (i32, i32) {
    %c0_i32 = arith.constant 0 : i32
    %c0_i32_0 = arith.constant 0 : i32
    %c0_i32_1 = arith.constant 0 : i32
    return %c0_i32, %c0_i32_0 : i32, i32
  }
  func.func @transform_2(%arg0: i32, %arg1: i32) -> (i32, i32, i32) {
    %c0_i32 = arith.constant 0 : i32
    %c0_i32_0 = arith.constant 0 : i32
    %c0_i32_1 = arith.constant 0 : i32
    return %arg0, %c0_i32, %c0_i32_0 : i32, i32, i32
  }
}

</mosaic_0001>

<llo_original>
// kernel: tpu_custom_call.1
$region0: #{tpu_custom_call.1}
  #allocation0 [shape = 'u32[]', space=smem, size = 0x4, offset = 0x4, fixed_abs, tag = 'smem constant byte address 0x4 - core index']
  #allocation1 [shape = 'u32[144,128]{1,0:T(1,128)}', space=vmem, size = 0x12000, scoped, tag = 'internal scratch']
  %s0 = inlined_call_operand.hbm [shape: f32[4,256], index: 0, kind: input, shape index: {}]
  %s1 = inlined_call_operand.vmem [shape: f32[1,128], index: 1, kind: input, shape index: {}]
  %s2 = inlined_call_operand.hbm [shape: f32[1,4,128], index: 2, kind: output, shape index: {}]
  %s3 = sld [smem:[#allocation0]]
  $region26: #{tpu_custom_call.1} parent=0
    _
  %s5 = ssub.s32 1, %s3
  %s6 = scalar_select 0, %s5, %s3
  $region1: #{tpu_custom_call.1} parent=0
    #allocation2 [shape = 'u8[4096]{0}', space=vmem, size = 0x1000, scoped, tag = 'input window, operand 0, single buffered']
    #allocation3 [shape = 's32[1]{0}', space=sflag, size = 0x4, scoped, tag = 'scoped memory for tpu_custom_call.1']
    #allocation4 [shape = 's32[1]{0}', space=sflag, size = 0x4, scoped, tag = 'scoped memory for tpu_custom_call.1']
    #allocation5 [shape = 'u8[2048]{0}', space=vmem, size = 0x800, scoped, tag = 'output window, operand 0, single buffered']
    %7 = vsyncpa [#allocation3], 0
    %8 = vsyncpa [#allocation4], 0
    // Predicated region
    $region2: #{tpu_custom_call.1} parent=1 // pred_check
      _
    $region3: #{tpu_custom_call.1} parent=1 // pred_check_branch
      %10 = sbr.rel (0) target = $region5
    $region4: #{tpu_custom_call.1} parent=1 // pred_region
      %s11 = sadd.s32 0, 0
      %s12 = smul.u32 2, %s11
      %s14 = ssub.s32 128, 128
      %15 = vsyncadd [#allocation3], %s14
      %s16 = smul.addr %s12, 64
      %s17 = scalar_lea.hbm %s0, %s16
      %s19 = sshll.u32 [#allocation2], 4
      %s20 = int_to_ptr.vmem [resolvable:$true] %s19
      %22 = dma.hbm_to_vmem [thread:$0]  %s17, 128, %s20, [#allocation3]
    $region5: #{tpu_custom_call.1} parent=1 // pred_fallthru
      _
    // Predicated region
    $region6: #{tpu_custom_call.1} parent=1 // pred_check
      _
    $region7: #{tpu_custom_call.1} parent=1 // pred_check_branch
      %24 = sbr.rel (0) target = $region9
    $region8: #{tpu_custom_call.1} parent=1 // pred_region
      _
    $region9: #{tpu_custom_call.1} parent=1 // pred_fallthru
      _
    // Predicated region
    $region10: #{tpu_custom_call.1} parent=1 // pred_check
      _
    $region11: #{tpu_custom_call.1} parent=1 // pred_check_branch
      %26 = sbr.rel (0) target = $region13
    $region12: #{tpu_custom_call.1} parent=1 // pred_region
      %27 = dma.done [#allocation3], 128
    $region13: #{tpu_custom_call.1} parent=1 // pred_fallthru
      _
    %s28 = sadd.s32 0, 0
    %s29 = smul.u32 2, %s28
    %p30 = scmp.eq.s32.totalorder 0, 0
    // Predicated region
    $region14: #{tpu_custom_call.1} parent=1 // pred_check
      %p31 = pneg %p30
    $region15: #{tpu_custom_call.1} parent=1 // pred_check_branch
      %33 = sbr.rel (%p31) target = $region17
    $region16: #{tpu_custom_call.1} parent=1 // pred_region
      %34 = vst [vmem:[#allocation5] sm:$0xf] 0.0
    $region17: #{tpu_custom_call.1} parent=1 // pred_fallthru
      _
    %s35 = sadd.s32 0, 0
    %s36 = smul.u32 %s35, 256
    %v37 = vlaneseq
    %v38 = vshrl.u32 %v37, 7
    %v39 = vadd.s32 %v38, 8
    %v40 = vadd.s32 %v38, 16
    %v41 = vadd.s32 %v38, 24
    %v42 = vadd.s32 %v38, 32
    %v43 = vadd.s32 %v38, 40
    %v44 = vadd.s32 %v38, 48
    %v45 = vadd.s32 %v38, 56
    %v46 = vadd.s32 %v38, 64
    %v47 = vadd.s32 %v38, 72
    %v48 = vadd.s32 %v38, 80
    %v49 = vadd.s32 %v38, 88
    %v50 = vadd.s32 %v38, 96
    %v51 = vadd.s32 %v38, 104
    %v52 = vadd.s32 %v38, 112
    %v53 = vadd.s32 %v38, 120
    %v54 = vadd.s32 %v38, 128
    %v55 = vadd.s32 %v38, 136
    %v56 = vadd.s32 %v38, 144
    %v57 = vadd.s32 %v38, 152
    %v58 = vadd.s32 %v38, 160
    %v59 = vadd.s32 %v38, 168
    %v60 = vadd.s32 %v38, 176
    %v61 = vadd.s32 %v38, 184
    %v62 = vadd.s32 %v38, 192
    %v63 = vadd.s32 %v38, 200
    %v64 = vadd.s32 %v38, 208
    %v65 = vadd.s32 %v38, 216
    %v66 = vadd.s32 %v38, 224
    %v67 = vadd.s32 %v38, 232
    %v68 = vadd.s32 %v38, 240
    %v69 = vadd.s32 %v38, 248
    %v70 = vstv %s36
    %v71 = vadd.s32 %v70, %v38
    %v72 = vadd.s32 %v70, %v39
    %v73 = vadd.s32 %v70, %v40
    %v74 = vadd.s32 %v70, %v41
    %v75 = vadd.s32 %v70, %v42
    %v76 = vadd.s32 %v70, %v43
    %v77 = vadd.s32 %v70, %v44
    %v78 = vadd.s32 %v70, %v45
    %v79 = vadd.s32 %v70, %v46
    %v80 = vadd.s32 %v70, %v47
    %v81 = vadd.s32 %v70, %v48
    %v82 = vadd.s32 %v70, %v49
    %v83 = vadd.s32 %v70, %v50
    %v84 = vadd.s32 %v70, %v51
    %v85 = vadd.s32 %v70, %v52
    %v86 = vadd.s32 %v70, %v53
    %v87 = vadd.s32 %v70, %v54
    %v88 = vadd.s32 %v70, %v55
    %v89 = vadd.s32 %v70, %v56
    %v90 = vadd.s32 %v70, %v57
    %v91 = vadd.s32 %v70, %v58
    %v92 = vadd.s32 %v70, %v59
    %v93 = vadd.s32 %v70, %v60
    %v94 = vadd.s32 %v70, %v61
    %v95 = vadd.s32 %v70, %v62
    %v96 = vadd.s32 %v70, %v63
    %v97 = vadd.s32 %v70, %v64
    %v98 = vadd.s32 %v70, %v65
    %v99 = vadd.s32 %v70, %v66
    %v100 = vadd.s32 %v70, %v67
    %v101 = vadd.s32 %v70, %v68
    %v102 = vadd.s32 %v70, %v69
    %v103 = vcvt.s32.f32 %v71
    %v104 = vcvt.s32.f32 %v72
    %v105 = vcvt.s32.f32 %v73
    %v106 = vcvt.s32.f32 %v74
    %v107 = vcvt.s32.f32 %v75
    %v108 = vcvt.s32.f32 %v76
    %v109 = vcvt.s32.f32 %v77
    %v110 = vcvt.s32.f32 %v78
    %v111 = vcvt.s32.f32 %v79
    %v112 = vcvt.s32.f32 %v80
    %v113 = vcvt.s32.f32 %v81
    %v114 = vcvt.s32.f32 %v82
    %v115 = vcvt.s32.f32 %v83
    %v116 = vcvt.s32.f32 %v84
    %v117 = vcvt.s32.f32 %v85
    %v118 = vcvt.s32.f32 %v86
    %v119 = vcvt.s32.f32 %v87
    %v120 = vcvt.s32.f32 %v88
    %v121 = vcvt.s32.f32 %v89
    %v122 = vcvt.s32.f32 %v90
    %v123 = vcvt.s32.f32 %v91
    %v124 = vcvt.s32.f32 %v92
    %v125 = vcvt.s32.f32 %v93
    %v126 = vcvt.s32.f32 %v94
    %v127 = vcvt.s32.f32 %v95
    %v128 = vcvt.s32.f32 %v96
    %v129 = vcvt.s32.f32 %v97
    %v130 = vcvt.s32.f32 %v98
    %v131 = vcvt.s32.f32 %v99
    %v132 = vcvt.s32.f32 %v100
    %v133 = vcvt.s32.f32 %v101
    %v134 = vcvt.s32.f32 %v102
    %v135 = vrsqrt.pop %v103
    %v136 = vmul.f32 %v103, %v135
    %vm137 = vcmp.eq.f32.partialorder %v103, inf
    %v138 = vsel %vm137, %v103, %v136
    %vm139 = vcmp.eq.f32.partialorder %v103, 0.0
    %v140 = vand.u32 %v103, 2147483648
    %v141 = vsel %vm139, %v140, %v138
    %v142 = vrsqrt.pop %v104
    %v143 = vmul.f32 %v104, %v142
    %vm144 = vcmp.eq.f32.partialorder %v104, inf
    %v145 = vsel %vm144, %v104, %v143
    %vm146 = vcmp.eq.f32.partialorder %v104, 0.0
    %v147 = vand.u32 %v104, 2147483648
    %v148 = vsel %vm146, %v147, %v145
    %v149 = vrsqrt.pop %v105
    %v150 = vmul.f32 %v105, %v149
    %vm151 = vcmp.eq.f32.partialorder %v105, inf
    %v152 = vsel %vm151, %v105, %v150
    %vm153 = vcmp.eq.f32.partialorder %v105, 0.0
    %v154 = vand.u32 %v105, 2147483648
    %v155 = vsel %vm153, %v154, %v152
    %v156 = vrsqrt.pop %v106
    %v157 = vmul.f32 %v106, %v156
    %vm158 = vcmp.eq.f32.partialorder %v106, inf
    %v159 = vsel %vm158, %v106, %v157
    %vm160 = vcmp.eq.f32.partialorder %v106, 0.0
    %v161 = vand.u32 %v106, 2147483648
    %v162 = vsel %vm160, %v161, %v159
    %v163 = vrsqrt.pop %v107
    %v164 = vmul.f32 %v107, %v163
    %vm165 = vcmp.eq.f32.partialorder %v107, inf
    %v166 = vsel %vm165, %v107, %v164
    %vm167 = vcmp.eq.f32.partialorder %v107, 0.0
    %v168 = vand.u32 %v107, 2147483648
    %v169 = vsel %vm167, %v168, %v166
    %v170 = vrsqrt.pop %v108
    %v171 = vmul.f32 %v108, %v170
    %vm172 = vcmp.eq.f32.partialorder %v108, inf
    %v173 = vsel %vm172, %v108, %v171
    %vm174 = vcmp.eq.f32.partialorder %v108, 0.0
    %v175 = vand.u32 %v108, 2147483648
    %v176 = vsel %vm174, %v175, %v173
    %v177 = vrsqrt.pop %v109
    %v178 = vmul.f32 %v109, %v177
    %vm179 = vcmp.eq.f32.partialorder %v109, inf
    %v180 = vsel %vm179, %v109, %v178
    %vm181 = vcmp.eq.f32.partialorder %v109, 0.0
    %v182 = vand.u32 %v109, 2147483648
    %v183 = vsel %vm181, %v182, %v180
    %v184 = vrsqrt.pop %v110
    %v185 = vmul.f32 %v110, %v184
    %vm186 = vcmp.eq.f32.partialorder %v110, inf
    %v187 = vsel %vm186, %v110, %v185
    %vm188 = vcmp.eq.f32.partialorder %v110, 0.0
    %v189 = vand.u32 %v110, 2147483648
    %v190 = vsel %vm188, %v189, %v187
    %v191 = vrsqrt.pop %v111
    %v192 = vmul.f32 %v111, %v191
    %vm193 = vcmp.eq.f32.partialorder %v111, inf
    %v194 = vsel %vm193, %v111, %v192
    %vm195 = vcmp.eq.f32.partialorder %v111, 0.0
    %v196 = vand.u32 %v111, 2147483648
    %v197 = vsel %vm195, %v196, %v194
    %v198 = vrsqrt.pop %v112
    %v199 = vmul.f32 %v112, %v198
    %vm200 = vcmp.eq.f32.partialorder %v112, inf
    %v201 = vsel %vm200, %v112, %v199
    %vm202 = vcmp.eq.f32.partialorder %v112, 0.0
    %v203 = vand.u32 %v112, 2147483648
    %v204 = vsel %vm202, %v203, %v201
    %v205 = vrsqrt.pop %v113
    %v206 = vmul.f32 %v113, %v205
    %vm207 = vcmp.eq.f32.partialorder %v113, inf
    %v208 = vsel %vm207, %v113, %v206
    %vm209 = vcmp.eq.f32.partialorder %v113, 0.0
    %v210 = vand.u32 %v113, 2147483648
    %v211 = vsel %vm209, %v210, %v208
    %v212 = vrsqrt.pop %v114
    %v213 = vmul.f32 %v114, %v212
    %vm214 = vcmp.eq.f32.partialorder %v114, inf
    %v215 = vsel %vm214, %v114, %v213
    %vm216 = vcmp.eq.f32.partialorder %v114, 0.0
    %v217 = vand.u32 %v114, 2147483648
    %v218 = vsel %vm216, %v217, %v215
    %v219 = vrsqrt.pop %v115
    %v220 = vmul.f32 %v115, %v219
    %vm221 = vcmp.eq.f32.partialorder %v115, inf
    %v222 = vsel %vm221, %v115, %v220
    %vm223 = vcmp.eq.f32.partialorder %v115, 0.0
    %v224 = vand.u32 %v115, 2147483648
    %v225 = vsel %vm223, %v224, %v222
    %v226 = vrsqrt.pop %v116
    %v227 = vmul.f32 %v116, %v226
    %vm228 = vcmp.eq.f32.partialorder %v116, inf
    %v229 = vsel %vm228, %v116, %v227
    %vm230 = vcmp.eq.f32.partialorder %v116, 0.0
    %v231 = vand.u32 %v116, 2147483648
    %v232 = vsel %vm230, %v231, %v229
    %v233 = vrsqrt.pop %v117
    %v234 = vmul.f32 %v117, %v233
    %vm235 = vcmp.eq.f32.partialorder %v117, inf
    %v236 = vsel %vm235, %v117, %v234
    %vm237 = vcmp.eq.f32.partialorder %v117, 0.0
    %v238 = vand.u32 %v117, 2147483648
    %v239 = vsel %vm237, %v238, %v236
    %v240 = vrsqrt.pop %v118
    %v241 = vmul.f32 %v118, %v240
    %vm242 = vcmp.eq.f32.partialorder %v118, inf
    %v243 = vsel %vm242, %v118, %v241
    %vm244 = vcmp.eq.f32.partialorder %v118, 0.0
    %v245 = vand.u32 %v118, 2147483648
    %v246 = vsel %vm244, %v245, %v243
    %v247 = vrsqrt.pop %v119
    %v248 = vmul.f32 %v119, %v247
    %vm249 = vcmp.eq.f32.partialorder %v119, inf
    %v250 = vsel %vm249, %v119, %v248
    %vm251 = vcmp.eq.f32.partialorder %v119, 0.0
    %v252 = vand.u32 %v119, 2147483648
    %v253 = vsel %vm251, %v252, %v250
    %v254 = vrsqrt.pop %v120
    %v255 = vmul.f32 %v120, %v254
    %vm256 = vcmp.eq.f32.partialorder %v120, inf
    %v257 = vsel %vm256, %v120, %v255
    %vm258 = vcmp.eq.f32.partialorder %v120, 0.0
    %v259 = vand.u32 %v120, 2147483648
    %v260 = vsel %vm258, %v259, %v257
    %v261 = vrsqrt.pop %v121
    %v262 = vmul.f32 %v121, %v261
    %vm263 = vcmp.eq.f32.partialorder %v121, inf
    %v264 = vsel %vm263, %v121, %v262
    %vm265 = vcmp.eq.f32.partialorder %v121, 0.0
    %v266 = vand.u32 %v121, 2147483648
    %v267 = vsel %vm265, %v266, %v264
    %v268 = vrsqrt.pop %v122
    %v269 = vmul.f32 %v122, %v268
    %vm270 = vcmp.eq.f32.partialorder %v122, inf
    %v271 = vsel %vm270, %v122, %v269
    %vm272 = vcmp.eq.f32.partialorder %v122, 0.0
    %v273 = vand.u32 %v122, 2147483648
    %v274 = vsel %vm272, %v273, %v271
    %v275 = vrsqrt.pop %v123
    %v276 = vmul.f32 %v123, %v275
    %vm277 = vcmp.eq.f32.partialorder %v123, inf
    %v278 = vsel %vm277, %v123, %v276
    %vm279 = vcmp.eq.f32.partialorder %v123, 0.0
    %v280 = vand.u32 %v123, 2147483648
    %v281 = vsel %vm279, %v280, %v278
    %v282 = vrsqrt.pop %v124
    %v283 = vmul.f32 %v124, %v282
    %vm284 = vcmp.eq.f32.partialorder %v124, inf
    %v285 = vsel %vm284, %v124, %v283
    %vm286 = vcmp.eq.f32.partialorder %v124, 0.0
    %v287 = vand.u32 %v124, 2147483648
    %v288 = vsel %vm286, %v287, %v285
    %v289 = vrsqrt.pop %v125
    %v290 = vmul.f32 %v125, %v289
    %vm291 = vcmp.eq.f32.partialorder %v125, inf
    %v292 = vsel %vm291, %v125, %v290
    %vm293 = vcmp.eq.f32.partialorder %v125, 0.0
    %v294 = vand.u32 %v125, 2147483648
    %v295 = vsel %vm293, %v294, %v292
    %v296 = vrsqrt.pop %v126
    %v297 = vmul.f32 %v126, %v296
    %vm298 = vcmp.eq.f32.partialorder %v126, inf
    %v299 = vsel %vm298, %v126, %v297
    %vm300 = vcmp.eq.f32.partialorder %v126, 0.0
    %v301 = vand.u32 %v126, 2147483648
    %v302 = vsel %vm300, %v301, %v299
    %v303 = vrsqrt.pop %v127
    %v304 = vmul.f32 %v127, %v303
    %vm305 = vcmp.eq.f32.partialorder %v127, inf
    %v306 = vsel %vm305, %v127, %v304
    %vm307 = vcmp.eq.f32.partialorder %v127, 0.0
    %v308 = vand.u32 %v127, 2147483648
    %v309 = vsel %vm307, %v308, %v306
    %v310 = vrsqrt.pop %v128
    %v311 = vmul.f32 %v128, %v310
    %vm312 = vcmp.eq.f32.partialorder %v128, inf
    %v313 = vsel %vm312, %v128, %v311
    %vm314 = vcmp.eq.f32.partialorder %v128, 0.0
    %v315 = vand.u32 %v128, 2147483648
    %v316 = vsel %vm314, %v315, %v313
    %v317 = vrsqrt.pop %v129
    %v318 = vmul.f32 %v129, %v317
    %vm319 = vcmp.eq.f32.partialorder %v129, inf
    %v320 = vsel %vm319, %v129, %v318
    %vm321 = vcmp.eq.f32.partialorder %v129, 0.0
    %v322 = vand.u32 %v129, 2147483648
    %v323 = vsel %vm321, %v322, %v320
    %v324 = vrsqrt.pop %v130
    %v325 = vmul.f32 %v130, %v324
    %vm326 = vcmp.eq.f32.partialorder %v130, inf
    %v327 = vsel %vm326, %v130, %v325
    %vm328 = vcmp.eq.f32.partialorder %v130, 0.0
    %v329 = vand.u32 %v130, 2147483648
    %v330 = vsel %vm328, %v329, %v327
    %v331 = vrsqrt.pop %v131
    %v332 = vmul.f32 %v131, %v331
    %vm333 = vcmp.eq.f32.partialorder %v131, inf
    %v334 = vsel %vm333, %v131, %v332
    %vm335 = vcmp.eq.f32.partialorder %v131, 0.0
    %v336 = vand.u32 %v131, 2147483648
    %v337 = vsel %vm335, %v336, %v334
    %v338 = vrsqrt.pop %v132
    %v339 = vmul.f32 %v132, %v338
    %vm340 = vcmp.eq.f32.partialorder %v132, inf
    %v341 = vsel %vm340, %v132, %v339
    %vm342 = vcmp.eq.f32.partialorder %v132, 0.0
    %v343 = vand.u32 %v132, 2147483648
    %v344 = vsel %vm342, %v343, %v341
    %v345 = vrsqrt.pop %v133
    %v346 = vmul.f32 %v133, %v345
    %vm347 = vcmp.eq.f32.partialorder %v133, inf
    %v348 = vsel %vm347, %v133, %v346
    %vm349 = vcmp.eq.f32.partialorder %v133, 0.0
    %v350 = vand.u32 %v133, 2147483648
    %v351 = vsel %vm349, %v350, %v348
    %v352 = vrsqrt.pop %v134
    %v353 = vmul.f32 %v134, %v352
    %vm354 = vcmp.eq.f32.partialorder %v134, inf
    %v355 = vsel %vm354, %v134, %v353
    %vm356 = vcmp.eq.f32.partialorder %v134, 0.0
    %v357 = vand.u32 %v134, 2147483648
    %v358 = vsel %vm356, %v357, %v355
    %v359 = vld [vmem:[%s1] sm:$0x1]
    %v361 = vlaneseq
    %v362 = vshrl.u32 %v361, 7
    %v363 = vsub.s32 0, %v362
    %v364 = vrot.slane %v359, %v363
    %v366 = vsub.f32 %v141, %v364
    %v367 = vsub.f32 %v148, %v364
    %v368 = vsub.f32 %v155, %v364
    %v369 = vsub.f32 %v162, %v364
    %v370 = vsub.f32 %v169, %v364
    %v371 = vsub.f32 %v176, %v364
    %v372 = vsub.f32 %v183, %v364
    %v373 = vsub.f32 %v190, %v364
    %v374 = vsub.f32 %v197, %v364
    %v375 = vsub.f32 %v204, %v364
    %v376 = vsub.f32 %v211, %v364
    %v377 = vsub.f32 %v218, %v364
    %v378 = vsub.f32 %v225, %v364
    %v379 = vsub.f32 %v232, %v364
    %v380 = vsub.f32 %v239, %v364
    %v381 = vsub.f32 %v246, %v364
    %v382 = vsub.f32 %v253, %v364
    %v383 = vsub.f32 %v260, %v364
    %v384 = vsub.f32 %v267, %v364
    %v385 = vsub.f32 %v274, %v364
    %v386 = vsub.f32 %v281, %v364
    %v387 = vsub.f32 %v288, %v364
    %v388 = vsub.f32 %v295, %v364
    %v389 = vsub.f32 %v302, %v364
    %v390 = vsub.f32 %v309, %v364
    %v391 = vsub.f32 %v316, %v364
    %v392 = vsub.f32 %v323, %v364
    %v393 = vsub.f32 %v330, %v364
    %v394 = vsub.f32 %v337, %v364
    %v395 = vsub.f32 %v344, %v364
    %v396 = vsub.f32 %v351, %v364
    %v397 = vsub.f32 %v358, %v364
    %v398 = vmul.f32 %v366, %v366
    %v399 = vmul.f32 %v367, %v367
    %v400 = vmul.f32 %v368, %v368
    %v401 = vmul.f32 %v369, %v369
    %v402 = vmul.f32 %v370, %v370
    %v403 = vmul.f32 %v371, %v371
    %v404 = vmul.f32 %v372, %v372
    %v405 = vmul.f32 %v373, %v373
    %v406 = vmul.f32 %v374, %v374
    %v407 = vmul.f32 %v375, %v375
    %v408 = vmul.f32 %v376, %v376
    %v409 = vmul.f32 %v377, %v377
    %v410 = vmul.f32 %v378, %v378
    %v411 = vmul.f32 %v379, %v379
    %v412 = vmul.f32 %v380, %v380
    %v413 = vmul.f32 %v381, %v381
    %v414 = vmul.f32 %v382, %v382
    %v415 = vmul.f32 %v383, %v383
    %v416 = vmul.f32 %v384, %v384
    %v417 = vmul.f32 %v385, %v385
    %v418 = vmul.f32 %v386, %v386
    %v419 = vmul.f32 %v387, %v387
    %v420 = vmul.f32 %v388, %v388
    %v421 = vmul.f32 %v389, %v389
    %v422 = vmul.f32 %v390, %v390
    %v423 = vmul.f32 %v391, %v391
    %v424 = vmul.f32 %v392, %v392
    %v425 = vmul.f32 %v393, %v393
    %v426 = vmul.f32 %v394, %v394
    %v427 = vmul.f32 %v395, %v395
    %v428 = vmul.f32 %v396, %v396
    %v429 = vmul.f32 %v397, %v397
    %v430 = vmul.f32 %v398, -2.0
    %v431 = vmul.f32 %v399, -2.0
    %v432 = vmul.f32 %v400, -2.0
    %v433 = vmul.f32 %v401, -2.0
    %v434 = vmul.f32 %v402, -2.0
    %v435 = vmul.f32 %v403, -2.0
    %v436 = vmul.f32 %v404, -2.0
    %v437 = vmul.f32 %v405, -2.0
    %v438 = vmul.f32 %v406, -2.0
    %v439 = vmul.f32 %v407, -2.0
    %v440 = vmul.f32 %v408, -2.0
    %v441 = vmul.f32 %v409, -2.0
    %v442 = vmul.f32 %v410, -2.0
    %v443 = vmul.f32 %v411, -2.0
    %v444 = vmul.f32 %v412, -2.0
    %v445 = vmul.f32 %v413, -2.0
    %v446 = vmul.f32 %v414, -2.0
    %v447 = vmul.f32 %v415, -2.0
    %v448 = vmul.f32 %v416, -2.0
    %v449 = vmul.f32 %v417, -2.0
    %v450 = vmul.f32 %v418, -2.0
    %v451 = vmul.f32 %v419, -2.0
    %v452 = vmul.f32 %v420, -2.0
    %v453 = vmul.f32 %v421, -2.0
    %v454 = vmul.f32 %v422, -2.0
    %v455 = vmul.f32 %v423, -2.0
    %v456 = vmul.f32 %v424, -2.0
    %v457 = vmul.f32 %v425, -2.0
    %v458 = vmul.f32 %v426, -2.0
    %v459 = vmul.f32 %v427, -2.0
    %v460 = vmul.f32 %v428, -2.0
    %v461 = vmul.f32 %v429, -2.0
    %v462 = vmul.f32 %v430, 1.442695
    %v463 = vpow.pop %v462
    %v464 = vmul.f32 %v431, 1.442695
    %v465 = vpow.pop %v464
    %v466 = vmul.f32 %v432, 1.442695
    %v467 = vpow.pop %v466
    %v468 = vmul.f32 %v433, 1.442695
    %v469 = vpow.pop %v468
    %v470 = vmul.f32 %v434, 1.442695
    %v471 = vpow.pop %v470
    %v472 = vmul.f32 %v435, 1.442695
    %v473 = vpow.pop %v472
    %v474 = vmul.f32 %v436, 1.442695
    %v475 = vpow.pop %v474
    %v476 = vmul.f32 %v437, 1.442695
    %v477 = vpow.pop %v476
    %v478 = vmul.f32 %v438, 1.442695
    %v479 = vpow.pop %v478
    %v480 = vmul.f32 %v439, 1.442695
    %v481 = vpow.pop %v480
    %v482 = vmul.f32 %v440, 1.442695
    %v483 = vpow.pop %v482
    %v484 = vmul.f32 %v441, 1.442695
    %v485 = vpow.pop %v484
    %v486 = vmul.f32 %v442, 1.442695
    %v487 = vpow.pop %v486
    %v488 = vmul.f32 %v443, 1.442695
    %v489 = vpow.pop %v488
    %v490 = vmul.f32 %v444, 1.442695
    %v491 = vpow.pop %v490
    %v492 = vmul.f32 %v445, 1.442695
    %v493 = vpow.pop %v492
    %v494 = vmul.f32 %v446, 1.442695
    %v495 = vpow.pop %v494
    %v496 = vmul.f32 %v447, 1.442695
    %v497 = vpow.pop %v496
    %v498 = vmul.f32 %v448, 1.442695
    %v499 = vpow.pop %v498
    %v500 = vmul.f32 %v449, 1.442695
    %v501 = vpow.pop %v500
    %v502 = vmul.f32 %v450, 1.442695
    %v503 = vpow.pop %v502
    %v504 = vmul.f32 %v451, 1.442695
    %v505 = vpow.pop %v504
    %v506 = vmul.f32 %v452, 1.442695
    %v507 = vpow.pop %v506
    %v508 = vmul.f32 %v453, 1.442695
    %v509 = vpow.pop %v508
    %v510 = vmul.f32 %v454, 1.442695
    %v511 = vpow.pop %v510
    %v512 = vmul.f32 %v455, 1.442695
    %v513 = vpow.pop %v512
    %v514 = vmul.f32 %v456, 1.442695
    %v515 = vpow.pop %v514
    %v516 = vmul.f32 %v457, 1.442695
    %v517 = vpow.pop %v516
    %v518 = vmul.f32 %v458, 1.442695
    %v519 = vpow.pop %v518
    %v520 = vmul.f32 %v459, 1.442695
    %v521 = vpow.pop %v520
    %v522 = vmul.f32 %v460, 1.442695
    %v523 = vpow.pop %v522
    %v524 = vmul.f32 %v461, 1.442695
    %v525 = vpow.pop %v524
    %v526 = vld [vmem:[#allocation5] sm:$0xf]
    %v527 = vld [vmem:[#allocation2] sm:$0xff]
    %v529 = vcombine.high %v527, %v527
    %531 = vmatprep.subr.mxu0 0.0
    %532 = vmatpush1.msra.mxu0 %v463
    %533 = vmatprep.subr.mxu0 0.0
    %534 = vmatpush1.msra.mxu0 %v465
    %535 = vmatprep.subr.mxu0 0.0
    %536 = vmatpush1.msra.mxu0 %v467
    %537 = vmatprep.subr.mxu0 0.0
    %538 = vmatpush1.msra.mxu0 %v469
    %539 = vmatprep.subr.mxu0 0.0
    %540 = vmatpush1.msra.mxu0 %v471
    %541 = vmatprep.subr.mxu0 0.0
    %542 = vmatpush1.msra.mxu0 %v473
    %543 = vmatprep.subr.mxu0 0.0
    %544 = vmatpush1.msra.mxu0 %v475
    %545 = vmatprep.subr.mxu0 0.0
    %546 = vmatpush1.msra.mxu0 %v477
    %547 = vmatprep.subr.mxu0 0.0
    %548 = vmatpush1.msra.mxu0 %v479
    %549 = vmatprep.subr.mxu0 0.0
    %550 = vmatpush1.msra.mxu0 %v481
    %551 = vmatprep.subr.mxu0 0.0
    %552 = vmatpush1.msra.mxu0 %v483
    %553 = vmatprep.subr.mxu0 0.0
    %554 = vmatpush1.msra.mxu0 %v485
    %555 = vmatprep.subr.mxu0 0.0
    %556 = vmatpush1.msra.mxu0 %v487
    %557 = vmatprep.subr.mxu0 0.0
    %558 = vmatpush1.msra.mxu0 %v489
    %559 = vmatprep.subr.mxu0 0.0
    %560 = vmatpush1.msra.mxu0 %v491
    %561 = vmatprep.subr.mxu0 0.0
    %562 = vmatpush1.msra.mxu0 %v493
    %563 = vmatprep.subr.mxu0 0.0
    %564 = vmatpush1.msra.mxu0 %v495
    %565 = vmatprep.subr.mxu0 0.0
    %566 = vmatpush1.msra.mxu0 %v497
    %567 = vmatprep.subr.mxu0 0.0
    %568 = vmatpush1.msra.mxu0 %v499
    %569 = vmatprep.subr.mxu0 0.0
    %570 = vmatpush1.msra.mxu0 %v501
    %571 = vmatprep.subr.mxu0 0.0
    %572 = vmatpush1.msra.mxu0 %v503
    %573 = vmatprep.subr.mxu0 0.0
    %574 = vmatpush1.msra.mxu0 %v505
    %575 = vmatprep.subr.mxu0 0.0
    %576 = vmatpush1.msra.mxu0 %v507
    %577 = vmatprep.subr.mxu0 0.0
    %578 = vmatpush1.msra.mxu0 %v509
    %579 = vmatprep.subr.mxu0 0.0
    %580 = vmatpush1.msra.mxu0 %v511
    %581 = vmatprep.subr.mxu0 0.0
    %582 = vmatpush1.msra.mxu0 %v513
    %583 = vmatprep.subr.mxu0 0.0
    %584 = vmatpush1.msra.mxu0 %v515
    %585 = vmatprep.subr.mxu0 0.0
    %586 = vmatpush1.msra.mxu0 %v517
    %587 = vmatprep.subr.mxu0 0.0
    %588 = vmatpush1.msra.mxu0 %v519
    %589 = vmatprep.subr.mxu0 0.0
    %590 = vmatpush1.msra.mxu0 %v521
    %591 = vmatprep.subr.mxu0 0.0
    %592 = vmatpush1.msra.mxu0 %v523
    %593 = vmatprep.subr.mxu0 0.0
    %594 = vmatpush1.msra.mxu0 %v525
    %595 = vmatprep.mubr.f32.mxu0 %v529
    %596 = vmatmul.mubr.f32.gmra.mrb[0].mxu0 %v527
    %v597 = vpop.f32.mrb[0].mxu0
    %v598 = vadd.f32 0.0, %v597
    %v599 = vpop.f32.mrb[0].mxu0
    %600 = vdwg.mxu0
    %v601 = vadd.f32 %v526, %v598
    %602 = vst [vmem:[#allocation5] sm:$0xf] %v601
    // Predicated region
    $region18: #{tpu_custom_call.1} parent=1 // pred_check
      _
    $region19: #{tpu_custom_call.1} parent=1 // pred_check_branch
      %604 = sbr.rel (0) target = $region21
    $region20: #{tpu_custom_call.1} parent=1 // pred_region
      %s606 = ssub.s32 64, 64
      %607 = vsyncadd [#allocation4], %s606
      %s609 = sshll.u32 [#allocation5], 4
      %s610 = int_to_ptr.vmem [resolvable:$true] %s609
      %612 = dma.vmem_to_hbm [thread:$0]  %s610, 64, %s2, [#allocation4]
    $region21: #{tpu_custom_call.1} parent=1 // pred_fallthru
      _
    // Predicated region
    $region22: #{tpu_custom_call.1} parent=1 // pred_check
      _
    $region23: #{tpu_custom_call.1} parent=1 // pred_check_branch
      %614 = sbr.rel (0) target = $region25
    $region24: #{tpu_custom_call.1} parent=1 // pred_region
      %615 = dma.done [#allocation4], 64
    $region25: #{tpu_custom_call.1} parent=1 // pred_fallthru
      _
    %616 = vsyncpa [#allocation3], 1
    %617 = vsyncpa [#allocation4], 1

</llo_original>
